<compile_context>
chip_gen: v7x
topology: tpu7x:2x2x1
jax: 0.10.0
libtpu: 0.0.40
codegen_flags: <defaults>
</compile_context>

<pallas_src>
import jax
import jax.numpy as jnp
import numpy as np
from jax import lax
from jax.experimental import pallas as pl
from jax.experimental.pallas import tpu as pltpu

EPS = 1e-6


def _round_up(v, m):
    return (v + m - 1) // m * m


def _softplus(v):
    # numerically stable softplus, matches torch.nn.functional.softplus
    return jnp.maximum(v, 0.0) + jnp.log1p(jnp.exp(-jnp.abs(v)))


def _make_kernel(C, d, tn, n_valid, n_pad, x_resident):
    need_mask = (n_pad != n_valid)   # static: last tile contains padded lanes

    def kernel(gamma_ref, x_ref, wq_ref, bq_ref, wkv_ref, bkv_ref, o_ref,
               kvt_acc, ksum_acc, en_acc, attn_bf, kvt_bf, *xkeep):
        p = pl.program_id(1)          # phase: 0 = accumulate, 1 = emit
        j = pl.program_id(2)          # N tile

        # ---------------- phase 0: accumulate KV^T, sum(K), energy ----------
        @pl.when(p == 0)
        def _accumulate():
            @pl.when(j == 0)
            def _():
                kvt_acc[...] = jnp.zeros_like(kvt_acc)
                ksum_acc[...] = jnp.zeros_like(ksum_acc)
                en_acc[...] = jnp.zeros_like(en_acc)

            x = x_ref[0]                                  # (C, tn) bf16
            if x_resident:
                # stash the tile so phase 1 never re-reads x from HBM
                xkeep[0][j] = x

            # fused value/key 1x1 convs: single (C+d, C) x (C, tn) bf16 matmul
            kv = (jnp.dot(wkv_ref[...], x, preferred_element_type=jnp.float32)
                  + bkv_ref[...])                         # (C+d, tn) f32
            v = kv[:C]                                    # (C, tn)
            k = _softplus(kv[C:])                         # (d, tn)
            if need_mask:
                # zero padded lanes of K so bias-only columns don't leak into
                # KV^T / sum(K); energy needs no mask (x is zero-padded).
                lane = j * tn + lax.broadcasted_iota(jnp.int32, (1, tn), 1)
                k = jnp.where(lane < n_valid, k, 0.0)

            # KV^T[c, m] += sum_n V[c, n] K[m, n]   (bf16 MXU, f32 accumulate)
            kvt_acc[...] += lax.dot_general(
                v.astype(jnp.bfloat16), k.astype(jnp.bfloat16),
                (((1,), (1,)), ((), ())), preferred_element_type=jnp.float32)
            ksum_acc[...] += jnp.sum(k, axis=-1, keepdims=True)       # (d, 1)
            # CAM energy[i, j] += sum_n x[i, n] x[j, n]
            en_acc[...] += lax.dot_general(
                x, x, (((1,), (1,)), ((), ())),
                preferred_element_type=jnp.float32)

        # ---------------- phase 1: finalize attention, emit output ----------
        @pl.when(p == 1)
        def _emit():
            @pl.when(j == 0)
            def _():
                # softmax(max(E) - E) == softmax(min(E) - E); stash the CAM
                # attention matrix and KV^T once as bf16 MXU operands so the
                # per-tile f32->bf16 casts disappear from the emit loop.
                e = en_acc[...]
                e = jnp.min(e, axis=-1, keepdims=True) - e
                pe = jnp.exp(e)
                attn = pe * pl.reciprocal(
                    jnp.sum(pe, axis=-1, keepdims=True), approx=True)
                attn_bf[...] = attn.astype(jnp.bfloat16)
                kvt_bf[...] = kvt_acc[...].astype(jnp.bfloat16)

            if x_resident:
                x = xkeep[0][j]                            # (C, tn) bf16, VMEM
            else:
                x = x_ref[0]                               # re-streamed tile

            # PAM (softplus linear attention) for this tile of columns
            q = _softplus(jnp.dot(wq_ref[...], x,
                                  preferred_element_type=jnp.float32)
                          + bq_ref[...])                              # (d, tn)
            denom = jnp.sum(q * (ksum_acc[...] + EPS), axis=0, keepdims=True)
            inv = pl.reciprocal(denom, approx=True)                   # (1, tn)
            wv_out = jnp.dot(kvt_bf[...], q.astype(jnp.bfloat16),
                             preferred_element_type=jnp.float32) * inv  # (C,tn)

            # CAM output for this tile of columns
            cam = jnp.dot(attn_bf[...], x,
                          preferred_element_type=jnp.float32)            # (C,tn)

            xf = x.astype(jnp.float32)
            out = xf + gamma_ref[0] * wv_out + (gamma_ref[1] * cam + xf)
            o_ref[0] = out.astype(o_ref.dtype)

    return kernel


def pam_cam_layer(x, params, *, tn=None, x_resident=None):
    """x: (B, C, H, W) NCHW, like the PyTorch module. Returns bf16 NCHW."""
    B, C, H, W = x.shape
    N = H * W
    d = params["wq"].shape[0]

    if tn is None:
        tn = min(512, _round_up(N, 128))      # >= 512 lanes only if available
    tn = _round_up(tn, 128)
    n_pad = _round_up(N, tn)
    nt = n_pad // tn

    # keep x resident in VMEM across both passes when it fits a small budget
    x_keep_bytes = nt * C * tn * 2
    if x_resident is None:
        x_resident = x_keep_bytes <= (8 << 20)

    # bf16 through HBM (halves in/out traffic of the mem-bound kernel)
    xf = x.reshape(B, C, N).astype(jnp.bfloat16)
    if n_pad != N:
        xf = jnp.pad(xf, ((0, 0), (0, 0), (0, n_pad - N)))

    gammas = jnp.stack([params["gamma_pam"], params["gamma_cam"]]).astype(jnp.float32)
    wq = params["wq"].astype(jnp.bfloat16)
    bq = params["bq"].astype(jnp.float32)
    # fuse the value and key 1x1-conv weights into one stacked matmul operand
    # ([wv; wk] keeps the k slice sublane-aligned when C % 8 == 0)
    wkv = jnp.concatenate([params["wv"], params["wk"]], axis=0).astype(jnp.bfloat16)
    bkv = jnp.concatenate([params["bv"], params["bk"]], axis=0).astype(jnp.float32)

    kernel = _make_kernel(C, d, tn, N, n_pad, x_resident)

    # explicit VMEM budget: double-buffered bf16 in/out tiles + f32 temporaries
    # + persistent accumulators (+ resident x copy); clamp to 64 MiB (v7x).
    blk = C * tn
    est = (4 * blk * 2                                   # x + out, 2x buffered
           + 12 * blk * 4                                # live f32 temporaries
           + 2 * (C + 2 * d + 2) * max(C, 128) * 4       # weights/biases
           + 2 * _round_up(C, 8) * (_round_up(C, 128) + 256) * 4  # accumulators
           + (x_keep_bytes if x_resident else 0)
           + (2 << 20))
    vmem_limit = int(min(max(est, 16 * 2 ** 20), 64 * 2 ** 20))

    if x_resident:
        # phase 0 walks the tiles; phase 1 parks the (unused) x window on the
        # last tile so no extra HBM DMA is issued during the emit pass.
        x_index = lambda b, p, j: (b, 0, j * (1 - p) + (nt - 1) * p)
    else:
        x_index = lambda b, p, j: (b, 0, j)

    scratch_shapes = [
        pltpu.VMEM((C, d), jnp.float32),    # KV^T accumulator
        pltpu.VMEM((d, 1), jnp.float32),    # sum_n K accumulator
        pltpu.VMEM((C, C), jnp.float32),    # CAM energy accumulator
        pltpu.VMEM((C, C), jnp.bfloat16),   # CAM attention (bf16 MXU operand)
        pltpu.VMEM((C, d), jnp.bfloat16),   # KV^T             (bf16 MXU operand)
    ]
    if x_resident:
        scratch_shapes.append(pltpu.VMEM((nt, C, tn), jnp.bfloat16))  # x copy

    out = pl.pallas_call(
        kernel,
        out_shape=jax.ShapeDtypeStruct((B, C, n_pad), jnp.bfloat16),
        grid=(B, 2, nt),
        in_specs=[
            pl.BlockSpec(memory_space=pltpu.MemorySpace.SMEM),      # gammas (2,)
            pl.BlockSpec((1, C, tn), x_index),                      # x tiles
            pl.BlockSpec((d, C), lambda b, p, j: (0, 0)),           # wq
            pl.BlockSpec((d, 1), lambda b, p, j: (0, 0)),           # bq
            pl.BlockSpec((C + d, C), lambda b, p, j: (0, 0)),       # [wv; wk]
            pl.BlockSpec((C + d, 1), lambda b, p, j: (0, 0)),       # [bv; bk]
        ],
        # phase 0 parks the (never-written) output window on tile 0, so output
        # revisits stay consecutive and only phase-1 data is written to HBM.
        out_specs=pl.BlockSpec((1, C, tn), lambda b, p, j: (b, 0, j * p)),
        scratch_shapes=scratch_shapes,
        compiler_params=pltpu.CompilerParams(
            dimension_semantics=("parallel", "arbitrary", "arbitrary"),
            vmem_limit_bytes=vmem_limit),
    )(gammas, xf, wq, bq, wkv, bkv)

    if n_pad != N:
        out = out[:, :, :N]
    return out.reshape(B, C, H, W)


def reference(x, params):
    """Pure-JAX f32 reference of PAM_CAM_Layer.forward (NCHW)."""
    B, C, H, W = x.shape
    N = H * W
    xf = x.reshape(B, C, N)

    # PAM (softplus linear attention)
    q = jax.nn.softplus(jnp.einsum("dc,bcn->bdn", params["wq"], xf) + params["bq"][None])
    k = jax.nn.softplus(jnp.einsum("dc,bcn->bdn", params["wk"], xf) + params["bk"][None])
    v = jnp.einsum("oc,bcn->bon", params["wv"], xf) + params["bv"][None]
    qp = jnp.transpose(q, (0, 2, 1))                    # (B, N, d)
    kv = jnp.einsum("bmn,bcn->bmc", k, v)               # (B, d, C)
    norm = 1.0 / jnp.einsum("bnm,bm->bn", qp, jnp.sum(k, -1) + EPS)
    wv_out = jnp.einsum("bnm,bmc,bn->bcn", qp, kv, norm)
    pam = xf + params["gamma_pam"] * wv_out

    # CAM (channel attention)
    energy = jnp.einsum("bcn,bdn->bcd", xf, xf)
    energy_new = jnp.max(energy, -1, keepdims=True) - energy
    attn = jax.nn.softmax(energy_new, axis=-1)
    cam = params["gamma_cam"] * jnp.einsum("bcd,bdn->bcn", attn, xf) + xf

    return (pam + cam).reshape(B, C, H, W)


if __name__ == "__main__":
    key = jax.random.PRNGKey(0)
    # H*W = 144 (not a multiple of 128) exercises lane padding + K masking;
    # tn=128 below gives 2 N-tiles, exercising the two-pass accumulation.
    B, C, H, W = 2, 16, 12, 12
    scale = 8
    d = C // scale                    # 1x1 conv q/k output channels

    ks = jax.random.split(key, 7)
    # Make x and weights bf16-representable so the bf16 kernel pipeline can be
    # checked tightly against the f32 reference on identical effective inputs.
    bf = lambda a: a.astype(jnp.bfloat16).astype(jnp.float32)
    x = bf(jax.random.normal(ks[0], (B, C, H, W), jnp.float32))
    params = dict(
        wq=bf(0.2 * jax.random.normal(ks[1], (d, C), jnp.float32)),
        bq=0.1 * jax.random.normal(ks[2], (d, 1), jnp.float32),
        wk=bf(0.2 * jax.random.normal(ks[3], (d, C), jnp.float32)),
        bk=0.1 * jax.random.normal(ks[4], (d, 1), jnp.float32),
        wv=bf(0.2 * jax.random.normal(ks[5], (C, C), jnp.float32)),
        bv=0.1 * jax.random.normal(ks[6], (C, 1), jnp.float32),
        # PyTorch inits both gammas to 0; nonzero values so both attention
        # paths actually influence the output under test.
        gamma_pam=jnp.float32(0.5),
        gamma_cam=jnp.float32(0.3),
    )

    ref = reference(x, params)

    # main path: x kept resident in VMEM (auto-selected for this size)
    out = jax.block_until_ready(pam_cam_layer(x, params, tn=128))
    np.testing.assert_allclose(np.asarray(out.astype(jnp.float32)),
                               np.asarray(ref), rtol=3e-2, atol=3e-2)

    # fallback path: x re-streamed from HBM in the emit pass (large-N config)
    out2 = jax.block_until_ready(pam_cam_layer(x, params, tn=128,
                                               x_resident=False))
    np.testing.assert_allclose(np.asarray(out2.astype(jnp.float32)),
                               np.asarray(ref), rtol=3e-2, atol=3e-2)

    print("KERNEL_OK")
</pallas_src>

<mosaic_0001>
module attributes {stable_mosaic.version = 11 : i64} {
  func.func @kernel(%arg0: i32, %arg1: i32, %arg2: i32, %arg3: memref<2xf32, #tpu.memory_space<smem>>, %arg4: memref<1x16x128xbf16, #tpu.memory_space<vmem>>, %arg5: memref<2x16xbf16, #tpu.memory_space<vmem>>, %arg6: memref<2x1xf32, #tpu.memory_space<vmem>>, %arg7: memref<18x16xbf16, #tpu.memory_space<vmem>>, %arg8: memref<18x1xf32, #tpu.memory_space<vmem>>, %arg9: memref<1x16x128xbf16, #tpu.memory_space<vmem>>, %arg10: memref<16x2xf32, #tpu.memory_space<vmem>>, %arg11: memref<2x1xf32, #tpu.memory_space<vmem>>, %arg12: memref<16x16xf32, #tpu.memory_space<vmem>>, %arg13: memref<16x16xbf16, #tpu.memory_space<vmem>>, %arg14: memref<16x2xbf16, #tpu.memory_space<vmem>>, %arg15: memref<2x16x128xbf16, #tpu.memory_space<vmem>>) attributes {dimension_semantics = [#tpu.dimension_semantics<parallel>, #tpu.dimension_semantics<arbitrary>, #tpu.dimension_semantics<arbitrary>], iteration_bounds = array<i64: 2, 2, 2>, scalar_prefetch = 0 : i64, scratch_operands = 6 : i64, tpu.core_type = #tpu.core_type<tc>, window_params = [{transform_indices = @transform_0, window_bounds = array<i64: 2>}, {transform_indices = @transform_1, window_bounds = array<i64: 1, 16, 128>}, {pipeline_mode = #tpu.pipeline_mode<synchronous>, transform_indices = @transform_2, window_bounds = array<i64: 2, 16>}, {pipeline_mode = #tpu.pipeline_mode<synchronous>, transform_indices = @transform_3, window_bounds = array<i64: 2, 1>}, {pipeline_mode = #tpu.pipeline_mode<synchronous>, transform_indices = @transform_4, window_bounds = array<i64: 18, 16>}, {pipeline_mode = #tpu.pipeline_mode<synchronous>, transform_indices = @transform_5, window_bounds = array<i64: 18, 1>}, {transform_indices = @transform_6, window_bounds = array<i64: 1, 16, 128>}]} {
    %c0_i32 = arith.constant 0 : i32
    %0 = arith.cmpi eq, %arg1, %c0_i32 : i32
    %1 = arith.extui %0 : i1 to i32
    %c0_i32_0 = arith.constant 0 : i32
    %2 = arith.cmpi ne, %1, %c0_i32_0 : i32
    scf.if %2 {
      %c0_i32_2 = arith.constant 0 : i32
      %6 = arith.cmpi eq, %arg2, %c0_i32_2 : i32
      %7 = arith.extui %6 : i1 to i32
      %c0_i32_3 = arith.constant 0 : i32
      %8 = arith.cmpi ne, %7, %c0_i32_3 : i32
      scf.if %8 {
        %cst_30 = arith.constant 0.000000e+00 : f32
        %55 = vector.broadcast %cst_30 : f32 to vector<16x2xf32>
        %c0_31 = arith.constant 0 : index
        %c0_32 = arith.constant 0 : index
        %56 = vector.load %arg10[%c0_31, %c0_32] : memref<16x2xf32, #tpu.memory_space<vmem>>, vector<16x2xf32>
        tpu.vector_store %arg10[%c0_31, %c0_32], %55 {strides = array<i32>} : memref<16x2xf32, #tpu.memory_space<vmem>>, vector<16x2xf32>,
        %cst_33 = arith.constant 0.000000e+00 : f32
        %57 = vector.broadcast %cst_33 : f32 to vector<2x1xf32>
        %c0_34 = arith.constant 0 : index
        %c0_35 = arith.constant 0 : index
        %58 = vector.load %arg11[%c0_34, %c0_35] : memref<2x1xf32, #tpu.memory_space<vmem>>, vector<2x1xf32>
        tpu.vector_store %arg11[%c0_34, %c0_35], %57 {strides = array<i32>} : memref<2x1xf32, #tpu.memory_space<vmem>>, vector<2x1xf32>,
        %cst_36 = arith.constant 0.000000e+00 : f32
        %59 = vector.broadcast %cst_36 : f32 to vector<16x16xf32>
        %c0_37 = arith.constant 0 : index
        %c0_38 = arith.constant 0 : index
        %60 = vector.load %arg12[%c0_37, %c0_38] : memref<16x16xf32, #tpu.memory_space<vmem>>, vector<16x16xf32>
        tpu.vector_store %arg12[%c0_37, %c0_38], %59 {strides = array<i32>} : memref<16x16xf32, #tpu.memory_space<vmem>>, vector<16x16xf32>,
      } else {
      }
      %c0 = arith.constant 0 : index
      %c0_4 = arith.constant 0 : index
      %c0_5 = arith.constant 0 : index
      %9 = vector.load %arg4[%c0, %c0_4, %c0_5] : memref<1x16x128xbf16, #tpu.memory_space<vmem>>, vector<1x16x128xbf16>
      %10 = vector.shape_cast %9 : vector<1x16x128xbf16> to vector<16x128xbf16>
      %11 = arith.index_cast %arg2 : i32 to index
      %c0_6 = arith.constant 0 : index
      %c0_7 = arith.constant 0 : index
      %12 = vector.load %arg15[%11, %c0_6, %c0_7] : memref<2x16x128xbf16, #tpu.memory_space<vmem>>, vector<1x16x128xbf16>
      %13 = vector.shape_cast %12 : vector<1x16x128xbf16> to vector<16x128xbf16>
      %14 = vector.shape_cast %10 : vector<16x128xbf16> to vector<1x16x128xbf16>
      tpu.vector_store %arg15[%11, %c0_6, %c0_7], %14 {strides = array<i32>} : memref<2x16x128xbf16, #tpu.memory_space<vmem>>, vector<1x16x128xbf16>,
      %c0_8 = arith.constant 0 : index
      %c0_9 = arith.constant 0 : index
      %15 = vector.load %arg7[%c0_8, %c0_9] : memref<18x16xbf16, #tpu.memory_space<vmem>>, vector<18x16xbf16>
      %cst = arith.constant dense<0.000000e+00> : vector<18x128xf32>
      %16 = tpu.matmul %15, %10, %cst {dimension_numbers = #tpu.dot_dimension_numbers<[1], [0], [0], [1], [0, 0, 1, 1], [], []>} : vector<18x16xbf16>, vector<16x128xbf16>, vector<18x128xf32> -> vector<18x128xf32>
      %c0_10 = arith.constant 0 : index
      %c0_11 = arith.constant 0 : index
      %17 = vector.load %arg8[%c0_10, %c0_11] : memref<18x1xf32, #tpu.memory_space<vmem>>, vector<18x1xf32>
      %18 = vector.broadcast %17 : vector<18x1xf32> to vector<18x128xf32>
      %19 = arith.addf %16, %18 : vector<18x128xf32>
      %20 = vector.extract_strided_slice %19 {offsets = [0, 0], sizes = [16, 128], strides = [1, 1]} : vector<18x128xf32> to vector<16x128xf32>
      %21 = vector.extract_strided_slice %19 {offsets = [16, 0], sizes = [2, 128], strides = [1, 1]} : vector<18x128xf32> to vector<2x128xf32>
      %cst_12 = arith.constant 0.000000e+00 : f32
      %22 = vector.broadcast %cst_12 : f32 to vector<2x128xf32>
      %23 = arith.maximumf %21, %22 : vector<2x128xf32>
      %24 = math.absf %21 : vector<2x128xf32>
      %cst_13 = arith.constant 0.000000e+00 : f32
      %25 = vector.broadcast %cst_13 : f32 to vector<2x128xf32>
      %26 = arith.subf %25, %24 : vector<2x128xf32>
      %27 = math.exp %26 : vector<2x128xf32>
      %28 = math.log1p %27 : vector<2x128xf32>
      %29 = arith.addf %23, %28 : vector<2x128xf32>
      %c128_i32 = arith.constant 128 : i32
      %30 = arith.muli %arg2, %c128_i32 : i32
      %31 = tpu.iota {dimensions = array<i32: 1>} : vector<1x128xi32>
      %32 = vector.broadcast %30 : i32 to vector<1x128xi32>
      %33 = arith.addi %32, %31 : vector<1x128xi32>
      %c144_i32 = arith.constant 144 : i32
      %34 = vector.broadcast %c144_i32 : i32 to vector<1x128xi32>
      %35 = arith.cmpi slt, %33, %34 : vector<1x128xi32>
      %cst_14 = arith.constant 0.000000e+00 : f32
      %36 = vector.shape_cast %35 : vector<1x128xi1> to vector<1x128xi1>
      %37 = vector.broadcast %36 : vector<1x128xi1> to vector<2x128xi1>
      %38 = vector.broadcast %cst_14 : f32 to vector<2x128xf32>
      %39 = arith.select %37, %29, %38 : vector<2x128xi1>, vector<2x128xf32>
      %c0_15 = arith.constant 0 : index
      %c0_16 = arith.constant 0 : index
      %40 = vector.load %arg10[%c0_15, %c0_16] : memref<16x2xf32, #tpu.memory_space<vmem>>, vector<16x2xf32>
      %41 = arith.truncf %20 : vector<16x128xf32> to vector<16x128xbf16>
      %42 = arith.truncf %39 : vector<2x128xf32> to vector<2x128xbf16>
      %cst_17 = arith.constant dense<0.000000e+00> : vector<16x2xf32>
      %43 = tpu.matmul %41, %42, %cst_17 {dimension_numbers = #tpu.dot_dimension_numbers<[1], [1], [0], [0], [0, 0, 1, 0], [], []>} : vector<16x128xbf16>, vector<2x128xbf16>, vector<16x2xf32> -> vector<16x2xf32>
      %44 = arith.addf %40, %43 : vector<16x2xf32>
      %c0_18 = arith.constant 0 : index
      %c0_19 = arith.constant 0 : index
      %45 = vector.load %arg10[%c0_18, %c0_19] : memref<16x2xf32, #tpu.memory_space<vmem>>, vector<16x2xf32>
      tpu.vector_store %arg10[%c0_18, %c0_19], %44 {strides = array<i32>} : memref<16x2xf32, #tpu.memory_space<vmem>>, vector<16x2xf32>,
      %c0_20 = arith.constant 0 : index
      %c0_21 = arith.constant 0 : index
      %46 = vector.load %arg11[%c0_20, %c0_21] : memref<2x1xf32, #tpu.memory_space<vmem>>, vector<2x1xf32>
      %cst_22 = arith.constant dense<0.000000e+00> : vector<2xf32>
      %47 = vector.multi_reduction <add>, %39, %cst_22 [1] : vector<2x128xf32> to vector<2xf32>
      %48 = vector.shape_cast %47 : vector<2xf32> to vector<2x1xf32>
      %49 = arith.addf %46, %48 : vector<2x1xf32>
      %c0_23 = arith.constant 0 : index
      %c0_24 = arith.constant 0 : index
      %50 = vector.load %arg11[%c0_23, %c0_24] : memref<2x1xf32, #tpu.memory_space<vmem>>, vector<2x1xf32>
      tpu.vector_store %arg11[%c0_23, %c0_24], %49 {strides = array<i32>} : memref<2x1xf32, #tpu.memory_space<vmem>>, vector<2x1xf32>,
      %c0_25 = arith.constant 0 : index
      %c0_26 = arith.constant 0 : index
      %51 = vector.load %arg12[%c0_25, %c0_26] : memref<16x16xf32, #tpu.memory_space<vmem>>, vector<16x16xf32>
      %cst_27 = arith.constant dense<0.000000e+00> : vector<16x16xf32>
      %52 = tpu.matmul %10, %10, %cst_27 {dimension_numbers = #tpu.dot_dimension_numbers<[1], [1], [0], [0], [0, 0, 1, 0], [], []>} : vector<16x128xbf16>, vector<16x128xbf16>, vector<16x16xf32> -> vector<16x16xf32>
      %53 = arith.addf %51, %52 : vector<16x16xf32>
      %c0_28 = arith.constant 0 : index
      %c0_29 = arith.constant 0 : index
      %54 = vector.load %arg12[%c0_28, %c0_29] : memref<16x16xf32, #tpu.memory_space<vmem>>, vector<16x16xf32>
      tpu.vector_store %arg12[%c0_28, %c0_29], %53 {strides = array<i32>} : memref<16x16xf32, #tpu.memory_space<vmem>>, vector<16x16xf32>,
    } else {
    }
    %c1_i32 = arith.constant 1 : i32
    %3 = arith.cmpi eq, %arg1, %c1_i32 : i32
    %4 = arith.extui %3 : i1 to i32
    %c0_i32_1 = arith.constant 0 : i32
    %5 = arith.cmpi ne, %4, %c0_i32_1 : i32
    scf.if %5 {
      %c0_i32_2 = arith.constant 0 : i32
      %6 = arith.cmpi eq, %arg2, %c0_i32_2 : i32
      %7 = arith.extui %6 : i1 to i32
      %c0_i32_3 = arith.constant 0 : i32
      %8 = arith.cmpi ne, %7, %c0_i32_3 : i32
      scf.if %8 {
        %c0_25 = arith.constant 0 : index
        %c0_26 = arith.constant 0 : index
        %54 = vector.load %arg12[%c0_25, %c0_26] : memref<16x16xf32, #tpu.memory_space<vmem>>, vector<16x16xf32>
        %cst_27 = arith.constant dense<0x7F800000> : vector<16xf32>
        %55 = vector.multi_reduction <minimumf>, %54, %cst_27 [1] : vector<16x16xf32> to vector<16xf32>
        %56 = vector.shape_cast %55 : vector<16xf32> to vector<16x1xf32>
        %57 = vector.broadcast %56 : vector<16x1xf32> to vector<16x16xf32>
        %58 = arith.subf %57, %54 : vector<16x16xf32>
        %59 = math.exp %58 : vector<16x16xf32>
        %cst_28 = arith.constant dense<0.000000e+00> : vector<16xf32>
        %60 = vector.multi_reduction <add>, %59, %cst_28 [1] : vector<16x16xf32> to vector<16xf32>
        %61 = vector.shape_cast %60 : vector<16xf32> to vector<16x1xf32>
        %62 = tpu.reciprocal %61 {approx = true} : vector<16x1xf32> -> vector<16x1xf32>
        %63 = vector.broadcast %62 : vector<16x1xf32> to vector<16x16xf32>
        %64 = arith.mulf %59, %63 : vector<16x16xf32>
        %65 = arith.truncf %64 : vector<16x16xf32> to vector<16x16xbf16>
        %c0_29 = arith.constant 0 : index
        %c0_30 = arith.constant 0 : index
        %66 = vector.load %arg13[%c0_29, %c0_30] : memref<16x16xbf16, #tpu.memory_space<vmem>>, vector<16x16xbf16>
        tpu.vector_store %arg13[%c0_29, %c0_30], %65 {strides = array<i32>} : memref<16x16xbf16, #tpu.memory_space<vmem>>, vector<16x16xbf16>,
        %c0_31 = arith.constant 0 : index
        %c0_32 = arith.constant 0 : index
        %67 = vector.load %arg10[%c0_31, %c0_32] : memref<16x2xf32, #tpu.memory_space<vmem>>, vector<16x2xf32>
        %68 = arith.truncf %67 : vector<16x2xf32> to vector<16x2xbf16>
        %c0_33 = arith.constant 0 : index
        %c0_34 = arith.constant 0 : index
        %69 = vector.load %arg14[%c0_33, %c0_34] : memref<16x2xbf16, #tpu.memory_space<vmem>>, vector<16x2xbf16>
        tpu.vector_store %arg14[%c0_33, %c0_34], %68 {strides = array<i32>} : memref<16x2xbf16, #tpu.memory_space<vmem>>, vector<16x2xbf16>,
      } else {
      }
      %9 = arith.index_cast %arg2 : i32 to index
      %c0 = arith.constant 0 : index
      %c0_4 = arith.constant 0 : index
      %10 = vector.load %arg15[%9, %c0, %c0_4] : memref<2x16x128xbf16, #tpu.memory_space<vmem>>, vector<1x16x128xbf16>
      %11 = vector.shape_cast %10 : vector<1x16x128xbf16> to vector<16x128xbf16>
      %c0_5 = arith.constant 0 : index
      %c0_6 = arith.constant 0 : index
      %12 = vector.load %arg5[%c0_5, %c0_6] : memref<2x16xbf16, #tpu.memory_space<vmem>>, vector<2x16xbf16>
      %cst = arith.constant dense<0.000000e+00> : vector<2x128xf32>
      %13 = tpu.matmul %12, %11, %cst {dimension_numbers = #tpu.dot_dimension_numbers<[1], [0], [0], [1], [0, 0, 1, 1], [], []>} : vector<2x16xbf16>, vector<16x128xbf16>, vector<2x128xf32> -> vector<2x128xf32>
      %c0_7 = arith.constant 0 : index
      %c0_8 = arith.constant 0 : index
      %14 = vector.load %arg6[%c0_7, %c0_8] : memref<2x1xf32, #tpu.memory_space<vmem>>, vector<2x1xf32>
      %15 = vector.broadcast %14 : vector<2x1xf32> to vector<2x128xf32>
      %16 = arith.addf %13, %15 : vector<2x128xf32>
      %cst_9 = arith.constant 0.000000e+00 : f32
      %17 = vector.broadcast %cst_9 : f32 to vector<2x128xf32>
      %18 = arith.maximumf %16, %17 : vector<2x128xf32>
      %19 = math.absf %16 : vector<2x128xf32>
      %cst_10 = arith.constant 0.000000e+00 : f32
      %20 = vector.broadcast %cst_10 : f32 to vector<2x128xf32>
      %21 = arith.subf %20, %19 : vector<2x128xf32>
      %22 = math.exp %21 : vector<2x128xf32>
      %23 = math.log1p %22 : vector<2x128xf32>
      %24 = arith.addf %18, %23 : vector<2x128xf32>
      %c0_11 = arith.constant 0 : index
      %c0_12 = arith.constant 0 : index
      %25 = vector.load %arg11[%c0_11, %c0_12] : memref<2x1xf32, #tpu.memory_space<vmem>>, vector<2x1xf32>
      %cst_13 = arith.constant 9.99999997E-7 : f32
      %26 = vector.broadcast %cst_13 : f32 to vector<2x1xf32>
      %27 = arith.addf %25, %26 : vector<2x1xf32>
      %28 = vector.broadcast %27 : vector<2x1xf32> to vector<2x128xf32>
      %29 = arith.mulf %24, %28 : vector<2x128xf32>
      %cst_14 = arith.constant dense<0.000000e+00> : vector<128xf32>
      %30 = vector.multi_reduction <add>, %29, %cst_14 [0] : vector<2x128xf32> to vector<128xf32>
      %31 = vector.shape_cast %30 : vector<128xf32> to vector<1x128xf32>
      %32 = tpu.reciprocal %31 {approx = true} : vector<1x128xf32> -> vector<1x128xf32>
      %c0_15 = arith.constant 0 : index
      %c0_16 = arith.constant 0 : index
      %33 = vector.load %arg14[%c0_15, %c0_16] : memref<16x2xbf16, #tpu.memory_space<vmem>>, vector<16x2xbf16>
      %34 = arith.truncf %24 : vector<2x128xf32> to vector<2x128xbf16>
      %cst_17 = arith.constant dense<0.000000e+00> : vector<16x128xf32>
      %35 = tpu.matmul %33, %34, %cst_17 {dimension_numbers = #tpu.dot_dimension_numbers<[1], [0], [0], [1], [0, 0, 1, 1], [], []>} : vector<16x2xbf16>, vector<2x128xbf16>, vector<16x128xf32> -> vector<16x128xf32>
      %36 = vector.broadcast %32 : vector<1x128xf32> to vector<16x128xf32>
      %37 = arith.mulf %35, %36 : vector<16x128xf32>
      %c0_18 = arith.constant 0 : index
      %c0_19 = arith.constant 0 : index
      %38 = vector.load %arg13[%c0_18, %c0_19] : memref<16x16xbf16, #tpu.memory_space<vmem>>, vector<16x16xbf16>
      %cst_20 = arith.constant dense<0.000000e+00> : vector<16x128xf32>
      %39 = tpu.matmul %38, %11, %cst_20 {dimension_numbers = #tpu.dot_dimension_numbers<[1], [0], [0], [1], [0, 0, 1, 1], [], []>} : vector<16x16xbf16>, vector<16x128xbf16>, vector<16x128xf32> -> vector<16x128xf32>
      %40 = arith.extf %11 : vector<16x128xbf16> to vector<16x128xf32>
      %c0_21 = arith.constant 0 : index
      %41 = memref.load %arg3[%c0_21] : memref<2xf32, #tpu.memory_space<smem>>
      %42 = vector.broadcast %41 : f32 to vector<16x128xf32>
      %43 = arith.mulf %42, %37 : vector<16x128xf32>
      %44 = arith.addf %40, %43 : vector<16x128xf32>
      %c1 = arith.constant 1 : index
      %45 = memref.load %arg3[%c1] : memref<2xf32, #tpu.memory_space<smem>>
      %46 = vector.broadcast %45 : f32 to vector<16x128xf32>
      %47 = arith.mulf %46, %39 : vector<16x128xf32>
      %48 = arith.addf %47, %40 : vector<16x128xf32>
      %49 = arith.addf %44, %48 : vector<16x128xf32>
      %50 = arith.truncf %49 : vector<16x128xf32> to vector<16x128xbf16>
      %c0_22 = arith.constant 0 : index
      %c0_23 = arith.constant 0 : index
      %c0_24 = arith.constant 0 : index
      %51 = vector.load %arg9[%c0_22, %c0_23, %c0_24] : memref<1x16x128xbf16, #tpu.memory_space<vmem>>, vector<1x16x128xbf16>
      %52 = vector.shape_cast %51 : vector<1x16x128xbf16> to vector<16x128xbf16>
      %53 = vector.shape_cast %50 : vector<16x128xbf16> to vector<1x16x128xbf16>
      tpu.vector_store %arg9[%c0_22, %c0_23, %c0_24], %53 {strides = array<i32>} : memref<1x16x128xbf16, #tpu.memory_space<vmem>>, vector<1x16x128xbf16>,
    } else {
    }
    return
  }
  func.func @transform_0(%arg0: i32, %arg1: i32, %arg2: i32) -> i32 {
    %c0_i32 = arith.constant 0 : i32
    %c0_i32_0 = arith.constant 0 : i32
    return %c0_i32 : i32
  }
  func.func @transform_1(%arg0: i32, %arg1: i32, %arg2: i32) -> (i32, i32, i32) {
    %c1_i32 = arith.constant 1 : i32
    %0 = arith.subi %c1_i32, %arg1 : i32
    %1 = arith.muli %arg2, %0 : i32
    %c1_i32_0 = arith.constant 1 : i32
    %2 = arith.muli %c1_i32_0, %arg1 : i32
    %3 = arith.addi %1, %2 : i32
    %c0_i32 = arith.constant 0 : i32
    %c0_i32_1 = arith.constant 0 : i32
    return %arg0, %c0_i32, %3 : i32, i32, i32
  }
  func.func @transform_2(%arg0: i32, %arg1: i32, %arg2: i32) -> (i32, i32) {
    %c0_i32 = arith.constant 0 : i32
    %c0_i32_0 = arith.constant 0 : i32
    %c0_i32_1 = arith.constant 0 : i32
    return %c0_i32, %c0_i32_0 : i32, i32
  }
  func.func @transform_3(%arg0: i32, %arg1: i32, %arg2: i32) -> (i32, i32) {
    %c0_i32 = arith.constant 0 : i32
    %c0_i32_0 = arith.constant 0 : i32
    %c0_i32_1 = arith.constant 0 : i32
    return %c0_i32, %c0_i32_0 : i32, i32
  }
  func.func @transform_4(%arg0: i32, %arg1: i32, %arg2: i32) -> (i32, i32) {
    %c0_i32 = arith.constant 0 : i32
    %c0_i32_0 = arith.constant 0 : i32
    %c0_i32_1 = arith.constant 0 : i32
    return %c0_i32, %c0_i32_0 : i32, i32
  }
  func.func @transform_5(%arg0: i32, %arg1: i32, %arg2: i32) -> (i32, i32) {
    %c0_i32 = arith.constant 0 : i32
    %c0_i32_0 = arith.constant 0 : i32
    %c0_i32_1 = arith.constant 0 : i32
    return %c0_i32, %c0_i32_0 : i32, i32
  }
  func.func @transform_6(%arg0: i32, %arg1: i32, %arg2: i32) -> (i32, i32, i32) {
    %0 = arith.muli %arg2, %arg1 : i32
    %c0_i32 = arith.constant 0 : i32
    %c0_i32_0 = arith.constant 0 : i32
    return %arg0, %c0_i32, %0 : i32, i32, i32
  }
}

</mosaic_0001>

<llo_original>
// kernel: tpu_custom_call.1
$region0: #{tpu_custom_call.1}
  #allocation0 [shape = 'u32[]', space=smem, size = 0x4, offset = 0x4, fixed_abs, tag = 'smem constant byte address 0x4 - core index']
  #allocation1 [shape = 'u32[144,128]{1,0:T(1,128)}', space=vmem, size = 0x12000, scoped, tag = 'internal scratch']
  #allocation2 [shape = 'f32[16,2]{1,0:T(8,128)}', space=vmem, size = 0x2000, scoped, tag = 'scratch operand']
  #allocation3 [shape = 'f32[2,1]{1,0:T(2,128)}', space=vmem, size = 0x400, scoped, tag = 'scratch operand']
  #allocation4 [shape = 'f32[16,16]{1,0:T(8,128)}', space=vmem, size = 0x2000, scoped, tag = 'scratch operand']
  #allocation5 [shape = 'bf16[16,16]{1,0:T(16,128)(2,1)}', space=vmem, size = 0x1000, scoped, tag = 'scratch operand']
  #allocation6 [shape = 'bf16[16,2]{1,0:T(16,128)(2,1)}', space=vmem, size = 0x1000, scoped, tag = 'scratch operand']
  #allocation7 [shape = 'bf16[2,16,128]{2,1,0:T(16,128)(2,1)}', space=vmem, size = 0x2000, scoped, tag = 'scratch operand']
  %s0 = inlined_call_operand.vmem [shape: f32[2], index: 0, kind: input, shape index: {}]
  %s1 = inlined_call_operand.vmem [shape: bf16[2,16,256], index: 1, kind: input, shape index: {}]
  %s2 = inlined_call_operand.vmem [shape: bf16[2,16], index: 2, kind: input, shape index: {}]
  %s3 = inlined_call_operand.vmem [shape: f32[2,1], index: 3, kind: input, shape index: {}]
  %s4 = inlined_call_operand.vmem [shape: bf16[18,16], index: 4, kind: input, shape index: {}]
  %s5 = inlined_call_operand.vmem [shape: f32[18,1], index: 5, kind: input, shape index: {}]
  %s6 = inlined_call_operand.hbm [shape: bf16[2,16,256], index: 6, kind: output, shape index: {}]
  %s7 = sld [smem:[#allocation0]]
  $region118: #{tpu_custom_call.1} parent=0
    _
  %s9 = ssub.s32 1, %s7
  %s10 = scalar_select 0, %s9, %s7
  $region1: #{tpu_custom_call.1} parent=0
    #allocation8 [shape = 'u8[512]{0}', space=smem, size = 0x200, scoped, tag = 'input window, operand 0, single buffered']
    #allocation9 [shape = 's32[2]{0}', space=sflag, size = 0x8, scoped, tag = 'scoped memory for tpu_custom_call.1']
    #allocation10 [shape = 's32[2]{0}', space=sflag, size = 0x8, scoped, tag = 'scoped memory for tpu_custom_call.1']
    #allocation11 [shape = 'u8[8192]{0}', space=vmem, size = 0x2000, scoped, tag = 'input window, operand 1']
    #allocation12 [shape = 'u8[8192]{0}', space=vmem, size = 0x2000, scoped, tag = 'output window, operand 0']
    %11 = vsyncpa [#allocation10], 0
    %12 = vsyncpa [#allocation9], 0
    %s13 = scalar_lea.sflag [#allocation9], 1
    %14 = vsyncpa %s13, 0
    loop: start=0, step=1, limit=10
    $region2: #{tpu_custom_call.1} parent=1 // loop_pre_header
      _
    $region3: #{tpu_custom_call.1} parent=1 // loop_header
      %s16 = sphi 0, %s20
      %p17 = scmp.ge.s32.totalorder %s16, 10
      %s23 = sphi 0, %s42
      %s24 = sphi 0, %s38
      %s25 = sphi 0, %s34
      %s26 = sphi 0, %s23
      %s27 = sphi 0, %s24
      %s28 = sphi 0, %s25
      %s29 = sphi 0, %s26
      %s30 = sphi 0, %s27
      %s31 = sphi 0, %s28
      %s43 = sphi 0, %s43
      %s45 = sphi 0, %s43
      %s46 = sphi 0, %s45
      %s60 = sphi 0, %s46
      %s74 = sphi 0, %s76
      %s77 = sphi 0, %s74
      %s78 = sphi 0, %s77
      %s94 = sphi 0, %s78
      %s98 = sphi 0, %s98
      %s100 = sphi 0, %s98
      %s101 = sphi 0, %s100
      %s115 = sphi 0, %s101
      %s119 = sphi 0, %s119
      %s121 = sphi 0, %s119
      %s122 = sphi 0, %s121
      %s136 = sphi 0, %s122
      %s140 = sphi 0, %s140
      %s142 = sphi 0, %s140
      %s143 = sphi 0, %s142
      %s157 = sphi 0, %s143
      %s161 = sphi 0, %s161
      %s163 = sphi 0, %s161
      %s164 = sphi 0, %s163
      %s178 = sphi 0, %s164
      %s188 = sphi 0, %s190
      %s191 = sphi 0, %s188
      %s192 = sphi 0, %s191
      %s208 = sphi 0, %s192
    $region4: #{tpu_custom_call.1} parent=1 // loop_header_branch
      %19 = sbr.rel (%p17) target = $region8
    $region5: #{tpu_custom_call.1} parent=1 // loop_body
      %s21 = ssub.s32 %s16, 1
      %s22 = ssub.s32 %s16, 2
      %s32 = sadd.s32 1, %s25
      %p33 = scmp.ge.s32.totalorder %s32, 2
      %s34 = scalar_select %p33, 0, %s32
      %s35 = sadd.s32 1, %s24
      %s36 = scalar_select %p33, %s35, %s24
      %p37 = scmp.ge.s32.totalorder %s36, 2
      %s38 = scalar_select %p37, 0, %s36
      %s39 = sadd.s32 1, %s23
      %s40 = scalar_select %p37, %s39, %s23
      %p41 = scmp.ge.s32.totalorder %s40, 2
      %s42 = scalar_select %p41, 0, %s40
      %s44 = sadd.s32 %s43, 1
      %p47 = scmp.eq.s32.totalorder %s16, 7
      %p48 = scmp.ne.s32.totalorder %s43, %s45
      %p49 = scmp.eq.s32.totalorder %s16, 0
      %p50 = por %p48, %p49
      %p51 = scmp.ne.s32.totalorder %s43, %s45
      %p52 = scmp.eq.s32.totalorder %s21, 7
      %p53 = por %p51, %p52
      %p54 = scmp.ne.s32.totalorder %s45, %s46
      %p55 = scmp.eq.s32.totalorder %s21, 0
      %p56 = por %p54, %p55
      %p57 = scmp.ne.s32.totalorder %s45, %s46
      %p58 = scmp.eq.s32.totalorder %s22, 7
      %p59 = por %p57, %p58
      %p61 = scmp.ne.s32.totalorder %s46, %s60
      %p62 = scmp.eq.s32.totalorder %s22, 0
      %p63 = por %p61, %p62
      %s64 = ssub.s32 1, %s24
      %s65 = smul.u32 %s25, %s64
      %s66 = sadd.s32 %s65, %s24
      %s67 = ssub.s32 1, %s38
      %s68 = smul.u32 %s34, %s67
      %s69 = sadd.s32 %s68, %s38
      %s70 = ssub.s32 %s23, %s42
      %s71 = ssub.s32 %s66, %s69
      %s72 = sor.u32 %s70, %s71
      %p73 = scmp.eq.s32.totalorder %s72, 0
      %s75 = sadd.s32 %s74, 1
      %s76 = scalar_select %p73, %s74, %s75
      %p79 = pneg %p73
      %p80 = scmp.eq.s32.totalorder %s16, 7
      %p81 = por %p79, %p80
      %p82 = scmp.ne.s32.totalorder %s74, %s77
      %p83 = scmp.eq.s32.totalorder %s16, 0
      %p84 = por %p82, %p83
      %p85 = scmp.ne.s32.totalorder %s74, %s77
      %p86 = scmp.eq.s32.totalorder %s21, 7
      %p87 = por %p85, %p86
      %p88 = scmp.ne.s32.totalorder %s77, %s78
      %p89 = scmp.eq.s32.totalorder %s21, 0
      %p90 = por %p88, %p89
      %p91 = scmp.ne.s32.totalorder %s77, %s78
      %p92 = scmp.eq.s32.totalorder %s22, 7
      %p93 = por %p91, %p92
      %p95 = scmp.ne.s32.totalorder %s78, %s94
      %p96 = scmp.eq.s32.totalorder %s22, 0
      %p97 = por %p95, %p96
      %s99 = sadd.s32 %s98, 1
      %p102 = scmp.eq.s32.totalorder %s16, 7
      %p103 = scmp.ne.s32.totalorder %s98, %s100
      %p104 = scmp.eq.s32.totalorder %s16, 0
      %p105 = por %p103, %p104
      %p106 = scmp.ne.s32.totalorder %s98, %s100
      %p107 = scmp.eq.s32.totalorder %s21, 7
      %p108 = por %p106, %p107
      %p109 = scmp.ne.s32.totalorder %s100, %s101
      %p110 = scmp.eq.s32.totalorder %s21, 0
      %p111 = por %p109, %p110
      %p112 = scmp.ne.s32.totalorder %s100, %s101
      %p113 = scmp.eq.s32.totalorder %s22, 7
      %p114 = por %p112, %p113
      %p116 = scmp.ne.s32.totalorder %s101, %s115
      %p117 = scmp.eq.s32.totalorder %s22, 0
      %p118 = por %p116, %p117
      %s120 = sadd.s32 %s119, 1
      %p123 = scmp.eq.s32.totalorder %s16, 7
      %p124 = scmp.ne.s32.totalorder %s119, %s121
      %p125 = scmp.eq.s32.totalorder %s16, 0
      %p126 = por %p124, %p125
      %p127 = scmp.ne.s32.totalorder %s119, %s121
      %p128 = scmp.eq.s32.totalorder %s21, 7
      %p129 = por %p127, %p128
      %p130 = scmp.ne.s32.totalorder %s121, %s122
      %p131 = scmp.eq.s32.totalorder %s21, 0
      %p132 = por %p130, %p131
      %p133 = scmp.ne.s32.totalorder %s121, %s122
      %p134 = scmp.eq.s32.totalorder %s22, 7
      %p135 = por %p133, %p134
      %p137 = scmp.ne.s32.totalorder %s122, %s136
      %p138 = scmp.eq.s32.totalorder %s22, 0
      %p139 = por %p137, %p138
      %s141 = sadd.s32 %s140, 1
      %p144 = scmp.eq.s32.totalorder %s16, 7
      %p145 = scmp.ne.s32.totalorder %s140, %s142
      %p146 = scmp.eq.s32.totalorder %s16, 0
      %p147 = por %p145, %p146
      %p148 = scmp.ne.s32.totalorder %s140, %s142
      %p149 = scmp.eq.s32.totalorder %s21, 7
      %p150 = por %p148, %p149
      %p151 = scmp.ne.s32.totalorder %s142, %s143
      %p152 = scmp.eq.s32.totalorder %s21, 0
      %p153 = por %p151, %p152
      %p154 = scmp.ne.s32.totalorder %s142, %s143
      %p155 = scmp.eq.s32.totalorder %s22, 7
      %p156 = por %p154, %p155
      %p158 = scmp.ne.s32.totalorder %s143, %s157
      %p159 = scmp.eq.s32.totalorder %s22, 0
      %p160 = por %p158, %p159
      %s162 = sadd.s32 %s161, 1
      %p165 = scmp.eq.s32.totalorder %s16, 7
      %p166 = scmp.ne.s32.totalorder %s161, %s163
      %p167 = scmp.eq.s32.totalorder %s16, 0
      %p168 = por %p166, %p167
      %p169 = scmp.ne.s32.totalorder %s161, %s163
      %p170 = scmp.eq.s32.totalorder %s21, 7
      %p171 = por %p169, %p170
      %p172 = scmp.ne.s32.totalorder %s163, %s164
      %p173 = scmp.eq.s32.totalorder %s21, 0
      %p174 = por %p172, %p173
      %p175 = scmp.ne.s32.totalorder %s163, %s164
      %p176 = scmp.eq.s32.totalorder %s22, 7
      %p177 = por %p175, %p176
      %p179 = scmp.ne.s32.totalorder %s164, %s178
      %p180 = scmp.eq.s32.totalorder %s22, 0
      %p181 = por %p179, %p180
      %s182 = smul.u32 %s25, %s24
      %s183 = smul.u32 %s34, %s38
      %s184 = ssub.s32 %s23, %s42
      %s185 = ssub.s32 %s182, %s183
      %s186 = sor.u32 %s184, %s185
      %p187 = scmp.eq.s32.totalorder %s186, 0
      %s189 = sadd.s32 %s188, 1
      %s190 = scalar_select %p187, %s188, %s189
      %p193 = pneg %p187
      %p194 = scmp.eq.s32.totalorder %s16, 7
      %p195 = por %p193, %p194
      %p196 = scmp.ne.s32.totalorder %s188, %s191
      %p197 = scmp.eq.s32.totalorder %s16, 0
      %p198 = por %p196, %p197
      %p199 = scmp.ne.s32.totalorder %s188, %s191
      %p200 = scmp.eq.s32.totalorder %s21, 7
      %p201 = por %p199, %p200
      %p202 = scmp.ne.s32.totalorder %s191, %s192
      %p203 = scmp.eq.s32.totalorder %s21, 0
      %p204 = por %p202, %p203
      %p205 = scmp.ne.s32.totalorder %s191, %s192
      %p206 = scmp.eq.s32.totalorder %s22, 7
      %p207 = por %p205, %p206
      %p209 = scmp.ne.s32.totalorder %s192, %s208
      %p210 = scmp.eq.s32.totalorder %s22, 0
      %p211 = por %p209, %p210
      %p212 = scmp.le.s32.totalorder 1, %s16
      %p213 = scmp.lt.s32.totalorder %s16, 9
      %p214 = pnand %p212, %p213
      %p215 = pneg %p214
      // Predicated region
      $region9: #{tpu_custom_call.1} parent=5 // pred_check
        _
      $region10: #{tpu_custom_call.1} parent=5 // pred_check_branch
        %217 = sbr.rel (%p214) target = $region12
      $region11: #{tpu_custom_call.1} parent=5 // pred_region
        %s218 = ssub.s32 %s16, 1
        // Predicated region
        $region13: #{tpu_custom_call.1} parent=11 // pred_check
          %p219 = pneg %p56
        $region14: #{tpu_custom_call.1} parent=11 // pred_check_branch
          %221 = sbr.rel (%p219) target = $region16
        $region15: #{tpu_custom_call.1} parent=11 // pred_region
          %s223 = ssub.s32 16, 16
          %224 = vsyncadd [#allocation10], %s223
          %s226 = sshll.u32 %s0, 4
          %s227 = int_to_ptr.vmem [resolvable:$true] %s226
          %229 = dma.vmem_to_smem %s227, 16, [#allocation8], [#allocation10]
        $region16: #{tpu_custom_call.1} parent=11 // pred_fallthru
          _
        // Predicated region
        $region17: #{tpu_custom_call.1} parent=11 // pred_check
          %p230 = pneg %p111
        $region18: #{tpu_custom_call.1} parent=11 // pred_check_branch
          %232 = sbr.rel (%p230) target = $region20
        $region19: #{tpu_custom_call.1} parent=11 // pred_region
          _
        $region20: #{tpu_custom_call.1} parent=11 // pred_fallthru
          _
        // Predicated region
        $region21: #{tpu_custom_call.1} parent=11 // pred_check
          %p233 = pneg %p132
        $region22: #{tpu_custom_call.1} parent=11 // pred_check_branch
          %235 = sbr.rel (%p233) target = $region24
        $region23: #{tpu_custom_call.1} parent=11 // pred_region
          _
        $region24: #{tpu_custom_call.1} parent=11 // pred_fallthru
          _
        // Predicated region
        $region25: #{tpu_custom_call.1} parent=11 // pred_check
          %p236 = pneg %p153
        $region26: #{tpu_custom_call.1} parent=11 // pred_check_branch
          %238 = sbr.rel (%p236) target = $region28
        $region27: #{tpu_custom_call.1} parent=11 // pred_region
          _
        $region28: #{tpu_custom_call.1} parent=11 // pred_fallthru
          _
        // Predicated region
        $region29: #{tpu_custom_call.1} parent=11 // pred_check
          %p239 = pneg %p174
        $region30: #{tpu_custom_call.1} parent=11 // pred_check_branch
          %241 = sbr.rel (%p239) target = $region32
        $region31: #{tpu_custom_call.1} parent=11 // pred_region
          _
        $region32: #{tpu_custom_call.1} parent=11 // pred_fallthru
          _
      $region12: #{tpu_custom_call.1} parent=5 // pred_fallthru
        _
      %p242 = scmp.lt.s32.totalorder %s16, 8
      // Predicated region
      $region33: #{tpu_custom_call.1} parent=5 // pred_check
        %p243 = pneg %p242
      $region34: #{tpu_custom_call.1} parent=5 // pred_check_branch
        %245 = sbr.rel (%p243) target = $region36
      $region35: #{tpu_custom_call.1} parent=5 // pred_region
        // Predicated region
        $region37: #{tpu_custom_call.1} parent=35 // pred_check
          %p246 = pneg %p84
        $region38: #{tpu_custom_call.1} parent=35 // pred_check_branch
          %248 = sbr.rel (%p246) target = $region40
        $region39: #{tpu_custom_call.1} parent=35 // pred_region
          %s249 = sand.u32 %s74, 1
          %s250 = sand.u32 %s74, 1
          %s251 = smul.addr %s250, 8
          %s252 = scalar_lea.vmem [#allocation11], %s251
          %s253 = ssub.s32 1, %s24
          %s254 = smul.u32 %s25, %s253
          %s255 = sadd.s32 %s254, %s24
          %s256 = smul.addr %s23, 4
          %s257 = sadd.s32 %s255, %s256
          %s258 = smul.addr %s257, 4
          %s259 = scalar_lea.vmem %s1, %s258
          // Predicated region
          $region41: #{tpu_custom_call.1} parent=39 // pred_check
            _
          $region42: #{tpu_custom_call.1} parent=39 // pred_check_branch
            %261 = sbr.rel (0) target = $region44
          $region43: #{tpu_custom_call.1} parent=39 // pred_region
            // Predicated region
            $region45: #{tpu_custom_call.1} parent=43 // pred_check
              _
            $region46: #{tpu_custom_call.1} parent=43 // pred_check_branch
              %263 = sbr.rel target = $region48
            $region47: #{tpu_custom_call.1} parent=43 // pred_region
              // Predicated region
              $region60: #{tpu_custom_call.1} parent=47 // pred_check
                _
              $region61: #{tpu_custom_call.1} parent=47 // pred_check_branch
                %280 = sbr.rel (0) target = $region63
              $region62: #{tpu_custom_call.1} parent=47 // pred_region
                loop: start=0, step=1, limit=1
                $region64: #{tpu_custom_call.1} parent=62 // loop_pre_header
                  _
                $region65: #{tpu_custom_call.1} parent=62 // loop_header
                  %s282 = sphi 0, %s286
                  %p283 = scmp.ge.s32.totalorder %s282, 1
                  %s287 = sphi %s259, %s259
                  %s288 = sphi %s252, %s252
                $region66: #{tpu_custom_call.1} parent=62 // loop_header_branch
                  %285 = sbr.rel (%p283) target = $region70
                $region67: #{tpu_custom_call.1} parent=62 // loop_body
                  _
                $region68: #{tpu_custom_call.1} parent=62 // loop_footer
                  %s286 = sadd.s32 1, %s282
                $region69: #{tpu_custom_call.1} parent=62 // loop_footer_branch
                  %281 = sbr.rel target = $region65
                $region70: #{tpu_custom_call.1} parent=62 // loop_exit
                  _
                loop: start=0, step=1, limit=1
                $region71: #{tpu_custom_call.1} parent=62 // loop_pre_header
                  _
                $region72: #{tpu_custom_call.1} parent=62 // loop_header
                  %s291 = sphi 0, %s295
                  %p292 = scmp.ge.s32.totalorder %s291, 1
                  %s296 = sphi %s259, %s259
                  %s297 = sphi %s252, %s252
                $region73: #{tpu_custom_call.1} parent=62 // loop_header_branch
                  %294 = sbr.rel (%p292) target = $region77
                $region74: #{tpu_custom_call.1} parent=62 // loop_body
                  %v298 = vld [vmem:[%s296] sm:$0xf]
                  %299 = vst [vmem:[%s297] sm:$0xf] %v298
                  %v300 = vld [vmem:[%s296 + $0x8] sm:$0xf]
                  %301 = vst [vmem:[%s297 + $0x4] sm:$0xf] %v300
                $region75: #{tpu_custom_call.1} parent=62 // loop_footer
                  %s295 = sadd.s32 1, %s291
                $region76: #{tpu_custom_call.1} parent=62 // loop_footer_branch
                  %290 = sbr.rel target = $region72
                $region77: #{tpu_custom_call.1} parent=62 // loop_exit
                  _
              $region63: #{tpu_custom_call.1} parent=47 // pred_fallthru
                _
            $region48: #{tpu_custom_call.1} parent=43 // pred_fallthru
              _
            // Predicated region
            $region49: #{tpu_custom_call.1} parent=43 // pred_check
              _
            $region50: #{tpu_custom_call.1} parent=43 // pred_check_branch
              %265 = sbr.rel (0) target = $region52
            $region51: #{tpu_custom_call.1} parent=43 // pred_region
              loop: start=0, step=1, limit=1
              $region53: #{tpu_custom_call.1} parent=51 // loop_pre_header
                _
              $region54: #{tpu_custom_call.1} parent=51 // loop_header
                %s268 = sphi 0, %s272
                %p269 = scmp.ge.s32.totalorder %s268, 1
                %s273 = sphi %s259, %s259
                %s274 = sphi %s252, %s252
              $region55: #{tpu_custom_call.1} parent=51 // loop_header_branch
                %271 = sbr.rel (%p269) target = $region59
              $region56: #{tpu_custom_call.1} parent=51 // loop_body
                %v275 = vld [vmem:[%s273] sm:$0xf]
                %276 = vst [vmem:[%s274] sm:$0xf] %v275
                %v277 = vld [vmem:[%s273 + $0x8] sm:$0xf]
                %278 = vst [vmem:[%s274 + $0x4] sm:$0xf] %v277
              $region57: #{tpu_custom_call.1} parent=51 // loop_footer
                %s272 = sadd.s32 1, %s268
              $region58: #{tpu_custom_call.1} parent=51 // loop_footer_branch
                %267 = sbr.rel target = $region54
              $region59: #{tpu_custom_call.1} parent=51 // loop_exit
                _
            $region52: #{tpu_custom_call.1} parent=43 // pred_fallthru
              _
          $region44: #{tpu_custom_call.1} parent=39 // pred_fallthru
            _
          %302 = vnop
        $region40: #{tpu_custom_call.1} parent=35 // pred_fallthru
          _
      $region36: #{tpu_custom_call.1} parent=5 // pred_fallthru
        _
      %p303 = scmp.le.s32.totalorder 1, %s16
      %p304 = scmp.lt.s32.totalorder %s16, 9
      %p305 = pnand %p303, %p304
      %p306 = pneg %p305
      // Predicated region
      $region78: #{tpu_custom_call.1} parent=5 // pred_check
        _
      $region79: #{tpu_custom_call.1} parent=5 // pred_check_branch
        %308 = sbr.rel (%p305) target = $region81
      $region80: #{tpu_custom_call.1} parent=5 // pred_region
        %s309 = ssub.s32 %s16, 1
        // Predicated region
        $region82: #{tpu_custom_call.1} parent=80 // pred_check
          %p310 = pneg %p56
        $region83: #{tpu_custom_call.1} parent=80 // pred_check_branch
          %312 = sbr.rel (%p310) target = $region85
        $region84: #{tpu_custom_call.1} parent=80 // pred_region
          %313 = dma.done [#allocation10], 16
        $region85: #{tpu_custom_call.1} parent=80 // pred_fallthru
          _
        %s314 = sand.u32 %s77, 1
        %s315 = sand.u32 %s77, 1
        %s316 = smul.addr %s315, 8
        %s317 = scalar_lea.vmem [#allocation11], %s316
        // Predicated region
        $region86: #{tpu_custom_call.1} parent=80 // pred_check
          %p318 = pneg %p90
        $region87: #{tpu_custom_call.1} parent=80 // pred_check_branch
          %320 = sbr.rel (%p318) target = $region89
        $region88: #{tpu_custom_call.1} parent=80 // pred_region
          _
        $region89: #{tpu_custom_call.1} parent=80 // pred_fallthru
          _
        %321 = sfence
        %p322 = pneg %p56
        %p323 = pneg %p53
        %s324 = sand.u32 %s77, 1
        %s325 = sand.u32 %s77, 1
        %s326 = smul.addr %s325, 8
        %s327 = scalar_lea.vmem [#allocation11], %s326
        %p328 = pneg %p90
        %p329 = pneg %p87
        %p330 = pneg %p111
        %p331 = pneg %p108
        %p332 = pneg %p132
        %p333 = pneg %p129
        %p334 = pneg %p153
        %p335 = pneg %p150
        %p336 = pneg %p174
        %p337 = pneg %p171
        %p338 = pneg %p204
        %p339 = pneg %p201
        %s340 = sand.u32 %s191, 1
        %s341 = scalar_lea.sflag [#allocation9], %s340
        %s342 = sand.u32 %s191, 1
        %s343 = smul.addr %s342, 8
        %s344 = scalar_lea.vmem [#allocation12], %s343
        %s345 = ssub.s32 1, %s27
        %s346 = smul.u32 %s28, %s345
        %s347 = sadd.s32 %s346, %s27
        %s348 = smul.u32 %s28, %s27
        %p350 = scmp.eq.s32.totalorder %s27, 0
        // Predicated region
        $region90: #{tpu_custom_call.1} parent=80 // pred_check
          %p351 = pneg %p350
        $region91: #{tpu_custom_call.1} parent=80 // pred_check_branch
          %353 = sbr.rel (%p351) target = $region93
        $region92: #{tpu_custom_call.1} parent=80 // pred_region
          %p354 = scmp.eq.s32.totalorder %s28, 0
          // Predicated region
          $region94: #{tpu_custom_call.1} parent=92 // pred_check
            %p355 = pneg %p354
          $region95: #{tpu_custom_call.1} parent=92 // pred_check_branch
            %357 = sbr.rel (%p355) target = $region97
          $region96: #{tpu_custom_call.1} parent=92 // pred_region
            %vm358 = vcmask 15360
            %359 = vst.msk [vmem:[#allocation2] sm:$0xff] %vm358, 0.0
            %360 = vst.msk [vmem:[#allocation2 + $0x8] sm:$0xff] %vm358, 0.0
            %vm361 = vcmask 1024
            %362 = vst.msk [vmem:[#allocation3] sm:$0x3] %vm361, 0.0
            %vm363 = vcmask 130048
            %364 = vst.msk [vmem:[#allocation4] sm:$0xff] %vm363, 0.0
            %365 = vst.msk [vmem:[#allocation4 + $0x8] sm:$0xff] %vm363, 0.0
          $region97: #{tpu_custom_call.1} parent=92 // pred_fallthru
            _
          %v366 = vld [vmem:[%s317] sm:$0xf]
          %v367 = vld [vmem:[%s317 + $0x4] sm:$0xf]
          %v370 = vunpack.c.l.b16 %v366
          %v371 = vunpack.c.l.b16 %v367
          %v372 = vpack.c.b16 %v371, %v370
          %s374 = smul.addr %s28, 8
          %s375 = scalar_lea.vmem [#allocation7], %s374
          %376 = vst [vmem:[%s375] sm:$0xff] %v372
          %v377 = vld [vmem:[%s4] sm:$0xf]
          %v378 = vld [vmem:[%s4 + $0x4] sm:$0xf]
          %v379 = vld [vmem:[%s4 + $0x8] sm:$0x1]
          %v380 = vld [vmem:[%s5] sm:$0xff]
          %v381 = vld [vmem:[%s5 + $0x8] sm:$0xff]
          %v382 = vld [vmem:[%s5 + $0x10] sm:$0x3]
          %384 = vset.pattern.permute.xlu0 0
          %385 = vperm.xlu0 %384, %v380
          %v386 = vpop.permute.xlu0 %385
          %389 = vset.pattern.permute.xlu0 0
          %390 = vperm.xlu0 %389, %v381
          %v391 = vpop.permute.xlu0 %390
          %394 = vset.pattern.permute.xlu0 0
          %395 = vperm.xlu0 %394, %v382
          %v396 = vpop.permute.xlu0 %395
          %v401 = vunpack.c.l.b16 %v377
          %v402 = vunpack.c.l.b16 %v378
          %v403 = vunpack.c.l.b16 %v379
          %v404 = vpack.c.b16 %v402, %v401
          %v405 = vpack.c.b16 %v403, %v403
          %vm406 = vcmask 130048
          %v408 = vsel %vm406, %v404, 0
          %v411 = vsel %vm406, %v405, 0
          %413 = vmatprep.subr.bf16.mxu0 0
          %414 = vmatpush1.bf16.msra.mxu0 %v372
          %415 = vmatprep.subr.bf16.mxu0 0
          %416 = vmatpush1.bf16.msra.mxu0 0
          %417 = vmatprep.subr.bf16.mxu0 0
          %418 = vmatpush1.bf16.msra.mxu0 0
          %419 = vmatprep.subr.bf16.mxu0 0
          %420 = vmatpush1.bf16.msra.mxu0 0
          %421 = vmatprep.subr.bf16.mxu0 0
          %422 = vmatpush1.bf16.msra.mxu0 0
          %423 = vmatprep.subr.bf16.mxu0 0
          %424 = vmatpush1.bf16.msra.mxu0 0
          %425 = vmatprep.subr.bf16.mxu0 0
          %426 = vmatpush1.bf16.msra.mxu0 0
          %427 = vmatprep.subr.bf16.mxu0 0
          %428 = vmatpush1.bf16.msra.mxu0 0
          %429 = vmatprep.subr.bf16.mxu0 0
          %430 = vmatpush1.bf16.msra.mxu0 0
          %431 = vmatprep.subr.bf16.mxu0 0
          %432 = vmatpush1.bf16.msra.mxu0 0
          %433 = vmatprep.subr.bf16.mxu0 0
          %434 = vmatpush1.bf16.msra.mxu0 0
          %435 = vmatprep.subr.bf16.mxu0 0
          %436 = vmatpush1.bf16.msra.mxu0 0
          %437 = vmatprep.subr.bf16.mxu0 0
          %438 = vmatpush1.bf16.msra.mxu0 0
          %439 = vmatprep.subr.bf16.mxu0 0
          %440 = vmatpush1.bf16.msra.mxu0 0
          %441 = vmatprep.subr.bf16.mxu0 0
          %442 = vmatpush1.bf16.msra.mxu0 0
          %443 = vmatprep.subr.bf16.mxu0 0
          %444 = vmatpush1.bf16.msra.mxu0 0
          %445 = vmatprep.mubr.bf16.mxu0 0
          %446 = vmatmul.mubr.bf16.gmra.mrb[0].mxu0 %v408
          %v447 = vpop.f32.mrb[0].mxu0
          %v448 = vadd.f32 %v386, %v447
          %v449 = vpop.f32.mrb[0].mxu0
          %v450 = vpop.f32.mrb[0].mxu0
          %v451 = vadd.f32 %v391, %v450
          %v452 = vpop.f32.mrb[0].mxu0
          %453 = vmatprep.mubr.bf16.mxu0 0
          %454 = vmatmul.mubr.bf16.gmra.mrb[0].mxu0 %v411
          %v455 = vpop.f32.mrb[0].mxu0
          %v456 = vadd.f32 %v396, %v455
          %v457 = vpop.f32.mrb[0].mxu0
          %v458 = vpop.f32.mrb[0].mxu0
          %v459 = vpop.f32.mrb[0].mxu0
          %460 = vdwg.mxu0
          %v461 = vmax.f32 %v456, 0.0
          %v462 = vand.u32 2147483647, %v456
          %v463 = vsub.f32 0.0, %v462
          %v464 = vmul.f32 %v463, 1.442695
          %v465 = vpow.pop %v464
          %v466 = vadd.f32 %v465, 1.0
          %v467 = vlog2.pop %v466
          %v468 = vmul.f32 %v467, 0.6931472
          %v469 = vmul.f32 -0.5, %v465
          %v470 = vadd.f32 %v469, 1.0
          %v471 = vmul.f32 %v470, %v465
          %v472 = vand.u32 2147483647, %v465
          %vm473 = vcmp.lt.f32.partialorder %v472, 0.0004427343
          %v474 = vsel %vm473, %v471, %v468
          %v475 = vadd.f32 %v461, %v474
          %s476 = smul.u32 %s28, 128
          %v477 = vlaneseq
          %v478 = vand.u32 %v477, 127
          %v479 = vstv %s476
          %v480 = vadd.s32 %v479, %v478
          %vm481 = vcmp.lt.s32.totalorder %v480, 144
          %v482 = vsel %vm481, 1, 0
          %vm483 = vcmp.eq.s32.totalorder %v482, 1
          %v484 = vsel %vm483, %v475, 0.0
          %v485 = vld [vmem:[#allocation2] sm:$0xff]
          %v486 = vld [vmem:[#allocation2 + $0x8] sm:$0xff]
          %v487 = vpack.c.bf16 %v451, %v448
          %v488 = vpack.c.bf16 %v484, %v484
          %489 = vmatprep.subr.bf16.mxu0 0
          %490 = vmatpush1.bf16.xpose.msra.mxu0 %v488
          %491 = vmatprep.subr.bf16.mxu0 0
          %492 = vmatpush1.bf16.xpose.msra.mxu0 0
          %493 = vmatprep.subr.bf16.mxu0 0
          %494 = vmatpush1.bf16.xpose.msra.mxu0 0
          %495 = vmatprep.subr.bf16.mxu0 0
          %496 = vmatpush1.bf16.xpose.msra.mxu0 0
          %497 = vmatprep.subr.bf16.mxu0 0
          %498 = vmatpush1.bf16.xpose.msra.mxu0 0
          %499 = vmatprep.subr.bf16.mxu0 0
          %500 = vmatpush1.bf16.xpose.msra.mxu0 0
          %501 = vmatprep.subr.bf16.mxu0 0
          %502 = vmatpush1.bf16.xpose.msra.mxu0 0
          %503 = vmatprep.subr.bf16.mxu0 0
          %504 = vmatpush1.bf16.xpose.msra.mxu0 0
          %505 = vmatprep.subr.bf16.mxu0 0
          %506 = vmatpush1.bf16.xpose.msra.mxu0 0
          %507 = vmatprep.subr.bf16.mxu0 0
          %508 = vmatpush1.bf16.xpose.msra.mxu0 0
          %509 = vmatprep.subr.bf16.mxu0 0
          %510 = vmatpush1.bf16.xpose.msra.mxu0 0
          %511 = vmatprep.subr.bf16.mxu0 0
          %512 = vmatpush1.bf16.xpose.msra.mxu0 0
          %513 = vmatprep.subr.bf16.mxu0 0
          %514 = vmatpush1.bf16.xpose.msra.mxu0 0
          %515 = vmatprep.subr.bf16.mxu0 0
          %516 = vmatpush1.bf16.xpose.msra.mxu0 0
          %517 = vmatprep.subr.bf16.mxu0 0
          %518 = vmatpush1.bf16.xpose.msra.mxu0 0
          %519 = vmatprep.subr.bf16.mxu0 0
          %520 = vmatpush1.bf16.xpose.msra.mxu0 0
          %521 = vmatprep.mubr.bf16.mxu0 0
          %522 = vmatmul.mubr.bf16.gmra.mrb[0].mxu0 %v487
          %v523 = vpop.f32.mrb[0].mxu0
          %v524 = vadd.f32 0.0, %v523
          %v525 = vpop.f32.mrb[0].mxu0
          %v526 = vpop.f32.mrb[0].mxu0
          %v527 = vadd.f32 0.0, %v526
          %v528 = vpop.f32.mrb[0].mxu0
          %529 = vdwg.mxu0
          %v530 = vadd.f32 %v485, %v524
          %v531 = vadd.f32 %v486, %v527
          %vm532 = vcmask 15360
          %533 = vst.msk [vmem:[#allocation2] sm:$0xff] %vm532, %v530
          %534 = vst.msk [vmem:[#allocation2 + $0x8] sm:$0xff] %vm532, %v531
          %v535 = vld [vmem:[#allocation3] sm:$0x3]
          %vm536 = vcmask 1041408
          %v537 = vsel %vm536, %v484, 0.0
          %538 = vadd.xlane.f32.xlu0 %v537
          %v539 = vpop.xlane.xlu0 %538
          %v540 = vadd.f32 %v535, %v539
          %vm541 = vcmask 1024
          %542 = vst.msk [vmem:[#allocation3] sm:$0x3] %vm541, %v540
          %v543 = vld [vmem:[#allocation4] sm:$0xff]
          %v544 = vld [vmem:[#allocation4 + $0x8] sm:$0xff]
          %545 = vmatprep.subr.bf16.mxu0 0
          %546 = vmatpush1.bf16.xpose.msra.mxu0 %v372
          %547 = vmatprep.subr.bf16.mxu0 0
          %548 = vmatpush1.bf16.xpose.msra.mxu0 0
          %549 = vmatprep.subr.bf16.mxu0 0
          %550 = vmatpush1.bf16.xpose.msra.mxu0 0
          %551 = vmatprep.subr.bf16.mxu0 0
          %552 = vmatpush1.bf16.xpose.msra.mxu0 0
          %553 = vmatprep.subr.bf16.mxu0 0
          %554 = vmatpush1.bf16.xpose.msra.mxu0 0
          %555 = vmatprep.subr.bf16.mxu0 0
          %556 = vmatpush1.bf16.xpose.msra.mxu0 0
          %557 = vmatprep.subr.bf16.mxu0 0
          %558 = vmatpush1.bf16.xpose.msra.mxu0 0
          %559 = vmatprep.subr.bf16.mxu0 0
          %560 = vmatpush1.bf16.xpose.msra.mxu0 0
          %561 = vmatprep.subr.bf16.mxu0 0
          %562 = vmatpush1.bf16.xpose.msra.mxu0 0
          %563 = vmatprep.subr.bf16.mxu0 0
          %564 = vmatpush1.bf16.xpose.msra.mxu0 0
          %565 = vmatprep.subr.bf16.mxu0 0
          %566 = vmatpush1.bf16.xpose.msra.mxu0 0
          %567 = vmatprep.subr.bf16.mxu0 0
          %568 = vmatpush1.bf16.xpose.msra.mxu0 0
          %569 = vmatprep.subr.bf16.mxu0 0
          %570 = vmatpush1.bf16.xpose.msra.mxu0 0
          %571 = vmatprep.subr.bf16.mxu0 0
          %572 = vmatpush1.bf16.xpose.msra.mxu0 0
          %573 = vmatprep.subr.bf16.mxu0 0
          %574 = vmatpush1.bf16.xpose.msra.mxu0 0
          %575 = vmatprep.subr.bf16.mxu0 0
          %576 = vmatpush1.bf16.xpose.msra.mxu0 0
          %577 = vmatprep.mubr.bf16.mxu0 0
          %578 = vmatmul.mubr.bf16.gmra.mrb[0].mxu0 %v372
          %v579 = vpop.f32.mrb[0].mxu0
          %v580 = vadd.f32 0.0, %v579
          %v581 = vpop.f32.mrb[0].mxu0
          %v582 = vpop.f32.mrb[0].mxu0
          %v583 = vadd.f32 0.0, %v582
          %v584 = vpop.f32.mrb[0].mxu0
          %585 = vdwg.mxu0
          %v586 = vadd.f32 %v543, %v580
          %v587 = vadd.f32 %v544, %v583
          %588 = vst.msk [vmem:[#allocation4] sm:$0xff] %vm406, %v586
          %589 = vst.msk [vmem:[#allocation4 + $0x8] sm:$0xff] %vm406, %v587
        $region93: #{tpu_custom_call.1} parent=80 // pred_fallthru
          _
        %p590 = scmp.eq.s32.totalorder %s27, 1
        // Predicated region
        $region98: #{tpu_custom_call.1} parent=80 // pred_check
          %p591 = pneg %p590
        $region99: #{tpu_custom_call.1} parent=80 // pred_check_branch
          %593 = sbr.rel (%p591) target = $region101
        $region100: #{tpu_custom_call.1} parent=80 // pred_region
          %p594 = scmp.eq.s32.totalorder %s28, 0
          // Predicated region
          $region102: #{tpu_custom_call.1} parent=100 // pred_check
            %p595 = pneg %p594
          $region103: #{tpu_custom_call.1} parent=100 // pred_check_branch
            %597 = sbr.rel (%p595) target = $region105
          $region104: #{tpu_custom_call.1} parent=100 // pred_region
            %v598 = vld [vmem:[#allocation4] sm:$0xff]
            %v599 = vld [vmem:[#allocation4 + $0x8] sm:$0xff]
            %vm600 = vcmask 130048
            %v601 = vsel %vm600, %v598, inf
            %602 = vmin.xlane.f32.xlu0 %v601
            %v603 = vpop.xlane.xlu0 %602
            %v604 = vsel %vm600, %v599, inf
            %605 = vmin.xlane.f32.xlu0 %v604
            %v606 = vpop.xlane.xlu0 %605
            %v607 = vsub.f32 %v603, %v598
            %v608 = vsub.f32 %v606, %v599
            %v609 = vmul.f32 %v607, 1.442695
            %v610 = vpow.pop %v609
            %v611 = vmul.f32 %v608, 1.442695
            %v612 = vpow.pop %v611
            %v613 = vsel %vm600, %v610, 0.0
            %614 = vadd.xlane.f32.xlu0 %v613
            %v615 = vpop.xlane.xlu0 %614
            %v616 = vsel %vm600, %v612, 0.0
            %617 = vadd.xlane.f32.xlu0 %v616
            %v618 = vpop.xlane.xlu0 %617
            %v619 = vrcp.pop %v615
            %v620 = vrcp.pop %v618
            %v621 = vmul.f32 %v610, %v619
            %v622 = vmul.f32 %v612, %v620
            %v623 = vpack.c.bf16 %v622, %v621
            %624 = vst.msk [vmem:[#allocation5] sm:$0xff] %vm600, %v623
            %v625 = vld [vmem:[#allocation2] sm:$0xff]
            %v626 = vld [vmem:[#allocation2 + $0x8] sm:$0xff]
            %v627 = vpack.c.bf16 %v626, %v625
            %vm628 = vcmask 15360
            %629 = vst.msk [vmem:[#allocation6] sm:$0xff] %vm628, %v627
          $region105: #{tpu_custom_call.1} parent=100 // pred_fallthru
            _
          %s630 = smul.addr %s28, 8
          %s631 = scalar_lea.vmem [#allocation7], %s630
          %v632 = vld [vmem:[%s631] sm:$0xff]
          %v633 = vld [vmem:[%s2] sm:$0x1]
          %v634 = vld [vmem:[%s3] sm:$0x3]
          %636 = vset.pattern.permute.xlu0 0
          %637 = vperm.xlu0 %636, %v634
          %v638 = vpop.permute.xlu0 %637
          %vm640 = vcmask 130048
          %v642 = vsel %vm640, %v633, 0
          %644 = vmatprep.subr.bf16.mxu0 0
          %645 = vmatpush1.bf16.msra.mxu0 %v632
          %646 = vmatprep.subr.bf16.mxu0 0
          %647 = vmatpush1.bf16.msra.mxu0 0
          %648 = vmatprep.subr.bf16.mxu0 0
          %649 = vmatpush1.bf16.msra.mxu0 0
          %650 = vmatprep.subr.bf16.mxu0 0
          %651 = vmatpush1.bf16.msra.mxu0 0
          %652 = vmatprep.subr.bf16.mxu0 0
          %653 = vmatpush1.bf16.msra.mxu0 0
          %654 = vmatprep.subr.bf16.mxu0 0
          %655 = vmatpush1.bf16.msra.mxu0 0
          %656 = vmatprep.subr.bf16.mxu0 0
          %657 = vmatpush1.bf16.msra.mxu0 0
          %658 = vmatprep.subr.bf16.mxu0 0
          %659 = vmatpush1.bf16.msra.mxu0 0
          %660 = vmatprep.subr.bf16.mxu0 0
          %661 = vmatpush1.bf16.msra.mxu0 0
          %662 = vmatprep.subr.bf16.mxu0 0
          %663 = vmatpush1.bf16.msra.mxu0 0
          %664 = vmatprep.subr.bf16.mxu0 0
          %665 = vmatpush1.bf16.msra.mxu0 0
          %666 = vmatprep.subr.bf16.mxu0 0
          %667 = vmatpush1.bf16.msra.mxu0 0
          %668 = vmatprep.subr.bf16.mxu0 0
          %669 = vmatpush1.bf16.msra.mxu0 0
          %670 = vmatprep.subr.bf16.mxu0 0
          %671 = vmatpush1.bf16.msra.mxu0 0
          %672 = vmatprep.subr.bf16.mxu0 0
          %673 = vmatpush1.bf16.msra.mxu0 0
          %674 = vmatprep.subr.bf16.mxu0 0
          %675 = vmatpush1.bf16.msra.mxu0 0
          %676 = vmatprep.mubr.bf16.mxu0 0
          %677 = vmatmul.mubr.bf16.gmra.mrb[0].mxu0 %v642
          %v678 = vpop.f32.mrb[0].mxu0
          %v679 = vadd.f32 %v638, %v678
          %v680 = vpop.f32.mrb[0].mxu0
          %v681 = vpop.f32.mrb[0].mxu0
          %v682 = vpop.f32.mrb[0].mxu0
          %683 = vdwg.mxu0
          %v684 = vmax.f32 %v679, 0.0
          %v685 = vand.u32 2147483647, %v679
          %v686 = vsub.f32 0.0, %v685
          %v687 = vmul.f32 %v686, 1.442695
          %v688 = vpow.pop %v687
          %v689 = vadd.f32 %v688, 1.0
          %v690 = vlog2.pop %v689
          %v691 = vmul.f32 %v690, 0.6931472
          %v692 = vmul.f32 -0.5, %v688
          %v693 = vadd.f32 %v692, 1.0
          %v694 = vmul.f32 %v693, %v688
          %v695 = vand.u32 2147483647, %v688
          %vm696 = vcmp.lt.f32.partialorder %v695, 0.0004427343
          %v697 = vsel %vm696, %v694, %v691
          %v698 = vadd.f32 %v684, %v697
          %v699 = vld [vmem:[#allocation3] sm:$0x3]
          %v700 = vadd.f32 %v699, 1e-06
          %702 = vset.pattern.permute.xlu0 0
          %703 = vperm.xlu0 %702, %v700
          %v704 = vpop.permute.xlu0 %703
          %v706 = vmul.f32 %v698, %v704
          %vm707 = vcmask 1041408
          %v708 = vsel %vm707, %v706, 0.0
          %v709 = vrot.slane %v708, 4
          %v710 = vadd.f32 %v708, %v709
          %v711 = vrot.slane %v710, 2
          %v712 = vadd.f32 %v710, %v711
          %v713 = vrot.slane %v712, 1
          %v714 = vadd.f32 %v712, %v713
          %v715 = vrcp.pop %v714
          %v716 = vld [vmem:[#allocation6] sm:$0xff]
          %v717 = vpack.c.bf16 %v698, %v698
          %vm718 = vcmask 15360
          %v720 = vsel %vm718, %v716, 0
          %vm722 = vcmask 1040384
          %v724 = vsel %vm722, %v717, 0
          %726 = vmatprep.subr.bf16.mxu0 0
          %727 = vmatpush1.bf16.msra.mxu0 %v724
          %728 = vmatprep.subr.bf16.mxu0 0
          %729 = vmatpush1.bf16.msra.mxu0 0
          %730 = vmatprep.subr.bf16.mxu0 0
          %731 = vmatpush1.bf16.msra.mxu0 0
          %732 = vmatprep.subr.bf16.mxu0 0
          %733 = vmatpush1.bf16.msra.mxu0 0
          %734 = vmatprep.subr.bf16.mxu0 0
          %735 = vmatpush1.bf16.msra.mxu0 0
          %736 = vmatprep.subr.bf16.mxu0 0
          %737 = vmatpush1.bf16.msra.mxu0 0
          %738 = vmatprep.subr.bf16.mxu0 0
          %739 = vmatpush1.bf16.msra.mxu0 0
          %740 = vmatprep.subr.bf16.mxu0 0
          %741 = vmatpush1.bf16.msra.mxu0 0
          %742 = vmatprep.subr.bf16.mxu0 0
          %743 = vmatpush1.bf16.msra.mxu0 0
          %744 = vmatprep.subr.bf16.mxu0 0
          %745 = vmatpush1.bf16.msra.mxu0 0
          %746 = vmatprep.subr.bf16.mxu0 0
          %747 = vmatpush1.bf16.msra.mxu0 0
          %748 = vmatprep.subr.bf16.mxu0 0
          %749 = vmatpush1.bf16.msra.mxu0 0
          %750 = vmatprep.subr.bf16.mxu0 0
          %751 = vmatpush1.bf16.msra.mxu0 0
          %752 = vmatprep.subr.bf16.mxu0 0
          %753 = vmatpush1.bf16.msra.mxu0 0
          %754 = vmatprep.subr.bf16.mxu0 0
          %755 = vmatpush1.bf16.msra.mxu0 0
          %756 = vmatprep.subr.bf16.mxu0 0
          %757 = vmatpush1.bf16.msra.mxu0 0
          %758 = vmatprep.mubr.bf16.mxu0 0
          %759 = vmatmul.mubr.bf16.gmra.mrb[0].mxu0 %v720
          %v760 = vpop.f32.mrb[0].mxu0
          %v761 = vadd.f32 0.0, %v760
          %v762 = vpop.f32.mrb[0].mxu0
          %v763 = vpop.f32.mrb[0].mxu0
          %v764 = vadd.f32 0.0, %v763
          %v765 = vpop.f32.mrb[0].mxu0
          %766 = vdwg.mxu0
          %v767 = vmul.f32 %v761, %v715
          %v768 = vmul.f32 %v764, %v715
          %v769 = vld [vmem:[#allocation5] sm:$0xff]
          %v771 = vsel %vm640, %v769, 0
          %773 = vmatprep.subr.bf16.mxu0 0
          %774 = vmatpush1.bf16.msra.mxu0 %v632
          %775 = vmatprep.subr.bf16.mxu0 0
          %776 = vmatpush1.bf16.msra.mxu0 0
          %777 = vmatprep.subr.bf16.mxu0 0
          %778 = vmatpush1.bf16.msra.mxu0 0
          %779 = vmatprep.subr.bf16.mxu0 0
          %780 = vmatpush1.bf16.msra.mxu0 0
          %781 = vmatprep.subr.bf16.mxu0 0
          %782 = vmatpush1.bf16.msra.mxu0 0
          %783 = vmatprep.subr.bf16.mxu0 0
          %784 = vmatpush1.bf16.msra.mxu0 0
          %785 = vmatprep.subr.bf16.mxu0 0
          %786 = vmatpush1.bf16.msra.mxu0 0
          %787 = vmatprep.subr.bf16.mxu0 0
          %788 = vmatpush1.bf16.msra.mxu0 0
          %789 = vmatprep.subr.bf16.mxu0 0
          %790 = vmatpush1.bf16.msra.mxu0 0
          %791 = vmatprep.subr.bf16.mxu0 0
          %792 = vmatpush1.bf16.msra.mxu0 0
          %793 = vmatprep.subr.bf16.mxu0 0
          %794 = vmatpush1.bf16.msra.mxu0 0
          %795 = vmatprep.subr.bf16.mxu0 0
          %796 = vmatpush1.bf16.msra.mxu0 0
          %797 = vmatprep.subr.bf16.mxu0 0
          %798 = vmatpush1.bf16.msra.mxu0 0
          %799 = vmatprep.subr.bf16.mxu0 0
          %800 = vmatpush1.bf16.msra.mxu0 0
          %801 = vmatprep.subr.bf16.mxu0 0
          %802 = vmatpush1.bf16.msra.mxu0 0
          %803 = vmatprep.subr.bf16.mxu0 0
          %804 = vmatpush1.bf16.msra.mxu0 0
          %805 = vmatprep.mubr.bf16.mxu0 0
          %806 = vmatmul.mubr.bf16.gmra.mrb[0].mxu0 %v771
          %v807 = vpop.f32.mrb[0].mxu0
          %v808 = vadd.f32 0.0, %v807
          %v809 = vpop.f32.mrb[0].mxu0
          %v810 = vpop.f32.mrb[0].mxu0
          %v811 = vadd.f32 0.0, %v810
          %v812 = vpop.f32.mrb[0].mxu0
          %813 = vdwg.mxu0
          %v814 = vunpack.c.l.bf16 %v632
          %v815 = vunpack.c.h.bf16 %v632
          %s816 = sld [smem:[#allocation8]]
          %v817 = vstv %s816
          %v818 = vmul.f32 %v817, %v767
          %v819 = vmul.f32 %v817, %v768
          %v820 = vadd.f32 %v814, %v818
          %v821 = vadd.f32 %v815, %v819
          %s822 = sld [smem:[#allocation8 + $0x1]]
          %v823 = vstv %s822
          %v824 = vmul.f32 %v823, %v808
          %v825 = vmul.f32 %v823, %v811
          %v826 = vadd.f32 %v824, %v814
          %v827 = vadd.f32 %v825, %v815
          %v828 = vadd.f32 %v820, %v826
          %v829 = vadd.f32 %v821, %v827
          %v830 = vpack.c.bf16 %v829, %v828
          %v832 = vunpack.c.l.b16 %v830
          %v833 = vunpack.c.h.b16 %v830
          %v834 = vpack.c.b16 %v832, %v832
          %v835 = vpack.c.b16 %v833, %v833
          %838 = vst [vmem:[%s344] sm:$0xf] %v834
          %839 = vst [vmem:[%s344 + $0x4] sm:$0xf] %v835
        $region101: #{tpu_custom_call.1} parent=80 // pred_fallthru
          _
        %s840 = sand.u32 %s191, 1
        %s841 = scalar_lea.sflag [#allocation9], %s840
        %s842 = sand.u32 %s191, 1
        %s843 = smul.addr %s842, 8
        %s844 = scalar_lea.vmem [#allocation12], %s843
        // Predicated region
        $region106: #{tpu_custom_call.1} parent=80 // pred_check
          %p845 = pneg %p201
        $region107: #{tpu_custom_call.1} parent=80 // pred_check_branch
          %847 = sbr.rel (%p845) target = $region109
        $region108: #{tpu_custom_call.1} parent=80 // pred_region
          %s848 = smul.u32 %s28, %s27
          %s850 = ssub.s32 128, 128
          %851 = vsyncadd %s841, %s850
          %s852 = smul.addr %s26, 4
          %s853 = sadd.s32 %s848, %s852
          %s854 = smul.addr %s853, 64
          %s855 = scalar_lea.hbm %s6, %s854
          %s856 = sshll.u32 %s844, 4
          %s857 = int_to_ptr.vmem [resolvable:$true] %s856
          %862 = dma.vmem_to_hbm [thread:$0]  %s857, 128, %s855, %s841, 64, 128, 4
        $region109: #{tpu_custom_call.1} parent=80 // pred_fallthru
          _
      $region81: #{tpu_custom_call.1} parent=5 // pred_fallthru
        _
      %p863 = scmp.le.s32.totalorder 2, %s16
      // Predicated region
      $region110: #{tpu_custom_call.1} parent=5 // pred_check
        %p864 = pneg %p863
      $region111: #{tpu_custom_call.1} parent=5 // pred_check_branch
        %866 = sbr.rel (%p864) target = $region113
      $region112: #{tpu_custom_call.1} parent=5 // pred_region
        %s867 = ssub.s32 %s16, 2
        // Predicated region
        $region114: #{tpu_custom_call.1} parent=112 // pred_check
          %p868 = pneg %p207
        $region115: #{tpu_custom_call.1} parent=112 // pred_check_branch
          %870 = sbr.rel (%p868) target = $region117
        $region116: #{tpu_custom_call.1} parent=112 // pred_region
          %s871 = sand.u32 %s192, 1
          %s872 = scalar_lea.sflag [#allocation9], %s871
          %s873 = sand.u32 %s192, 1
          %s874 = smul.addr %s873, 8
          %s875 = scalar_lea.vmem [#allocation12], %s874
          %876 = dma.done %s872, 128
        $region117: #{tpu_custom_call.1} parent=112 // pred_fallthru
          _
      $region113: #{tpu_custom_call.1} parent=5 // pred_fallthru
        _
    $region6: #{tpu_custom_call.1} parent=1 // loop_footer
      %s20 = sadd.s32 1, %s16
    $region7: #{tpu_custom_call.1} parent=1 // loop_footer_branch
      %15 = sbr.rel target = $region3
    $region8: #{tpu_custom_call.1} parent=1 // loop_exit
      _
    %877 = vsyncpa [#allocation9], 1
    %s878 = scalar_lea.sflag [#allocation9], 1
    %879 = vsyncpa %s878, 1
    %880 = vsyncpa [#allocation10], 1
    %s881 = scalar_lea.sflag [#allocation10], 1
    %882 = vsyncpa %s881, 1

</llo_original>
